<compile_context>
chip_gen: v7x
topology: tpu7x:2x2x1
jax: 0.10.0
libtpu: 0.0.40
codegen_flags: <defaults>
</compile_context>

<pallas_src>
import functools

import jax
import jax.numpy as jnp
import numpy as np
from jax import lax
from jax.experimental import pallas as pl
from jax.experimental.pallas import tpu as pltpu


def _round_up(x, m):
    return ((x + m - 1) // m) * m


def _vmem_limit_bytes():
    """Generation-aware scoped-VMEM limit (v5e/v6e: 128 MiB physical, v7x: 64 MiB/TC)."""
    try:
        cap = int(pltpu.get_tpu_info().vmem_capacity_bytes)
    except Exception:
        cap = 64 << 20  # conservative fallback (v7x per-TC); also covers interpret mode
    return min((cap * 3) // 4, 100 << 20)


# ---------------------------------------------------------------------------
# Kernels
# ---------------------------------------------------------------------------

def _support_kernel(x_ref, w_ref, s_ref):
    """support = x @ W_pack   (row-tiled; packed weight slab stays VMEM-resident)."""
    s_ref[...] = jnp.dot(x_ref[...], w_ref[...],
                         preferred_element_type=jnp.float32).astype(s_ref.dtype)


def _masked_leaky(acc, b_ref, mask_ref, *, h, alpha):
    """LeakyReLU(acc + b) then zero the inactive half of the packed layout.

    Packed layout: user rows keep lanes [0:h], item rows keep lanes [h:2h]; every other
    lane is zeroed so the duplicated downstream weight rows pick the right half.
    Pure elementwise f32 math (no cross-lane movement, no program_id).
    """
    z = acc + b_ref[...]                                   # (tm, P) f32
    act = jnp.where(z > 0.0, z, alpha * z)
    lane = lax.broadcasted_iota(jnp.int32, act.shape, 1)
    user_keep = (lane < h).astype(act.dtype)
    item_keep = ((lane >= h) & (lane < 2 * h)).astype(act.dtype)
    m = mask_ref[...]                                      # (tm, 1) f32: 1.0 user / 0.0 item
    keep = m * user_keep + (1.0 - m) * item_keep
    return act * keep


def _gcn_pair_kernel(adj_ref, sup_ref, b_ref, mask_ref, o_ref, acc_ref,
                     *, h, alpha, sup_tk):
    """Stage 1: aui_packed[i_tile] = mask(LeakyReLU(adj[i_tile] @ support + b))."""
    k = pl.program_id(1)

    @pl.when(k == 0)
    def _():
        acc_ref[...] = jnp.zeros_like(acc_ref)

    if sup_tk is None:                       # streaming sup: block already is the K-tile
        sup = sup_ref[...]
    else:                                    # VMEM-resident sup: slice the K-tile in VMEM
        sup = sup_ref[pl.ds(k * sup_tk, sup_tk), :]
    acc_ref[...] += jnp.dot(adj_ref[...], sup, preferred_element_type=jnp.float32)

    @pl.when(k == pl.num_programs(1) - 1)
    def _():
        o_ref[...] = _masked_leaky(acc_ref[...], b_ref, mask_ref,
                                   h=h, alpha=alpha).astype(o_ref.dtype)


def _gcn_pair_union_kernel(adj_ref, sup_ref, b_ref, mask_ref, fea_ref,
                           wuh_ref, wuf_ref, bu_ref, o_ref, acc_ref,
                           *, h, alpha, sup_tk):
    """Stage 2 + fused Union: out = relu(aui_ho_packed @ Wu_h + fea @ Wu_f + bu)."""
    k = pl.program_id(1)

    @pl.when(k == 0)
    def _():
        acc_ref[...] = jnp.zeros_like(acc_ref)

    if sup_tk is None:
        sup = sup_ref[...]
    else:
        sup = sup_ref[pl.ds(k * sup_tk, sup_tk), :]
    acc_ref[...] += jnp.dot(adj_ref[...], sup, preferred_element_type=jnp.float32)

    @pl.when(k == pl.num_programs(1) - 1)
    def _():
        aui_ho = _masked_leaky(acc_ref[...], b_ref, mask_ref, h=h, alpha=alpha)
        y = jnp.dot(aui_ho.astype(wuh_ref.dtype), wuh_ref[...],
                    preferred_element_type=jnp.float32)
        y = y + jnp.dot(fea_ref[...], wuf_ref[...],
                        preferred_element_type=jnp.float32)
        y = y + bu_ref[...]
        o_ref[...] = jnp.maximum(y, 0.0).astype(o_ref.dtype)


# ---------------------------------------------------------------------------
# pallas_call wrappers
# ---------------------------------------------------------------------------

def _call_support(x, w_pack, *, tile, vmem_limit):
    n_pad, fin = x.shape
    p = w_pack.shape[1]
    return pl.pallas_call(
        _support_kernel,
        out_shape=jax.ShapeDtypeStruct((n_pad, p), x.dtype),
        grid_spec=pltpu.PrefetchScalarGridSpec(
            num_scalar_prefetch=0,
            grid=(n_pad // tile,),
            in_specs=[pl.BlockSpec((tile, fin), lambda i: (i, 0)),
                      pl.BlockSpec((fin, p), lambda i: (0, 0))],
            out_specs=pl.BlockSpec((tile, p), lambda i: (i, 0)),
        ),
        compiler_params=pltpu.CompilerParams(
            dimension_semantics=("parallel",),
            vmem_limit_bytes=vmem_limit),
    )(x, w_pack)


def _sup_spec(n_pad, tk, p, resident):
    if resident:
        # Full slab, constant block index -> DMA'd into VMEM exactly once.
        return pl.BlockSpec((n_pad, p), lambda i, k: (0, 0))
    return pl.BlockSpec((tk, p), lambda i, k: (k, 0))


def _call_gcn_pair(adj_p, sup, b_pack, mask_u, *, h, alpha, tm, tk, p,
                   out_dtype, resident_sup, vmem_limit):
    n_pad = adj_p.shape[0]
    kernel = functools.partial(_gcn_pair_kernel, h=h, alpha=alpha,
                               sup_tk=(tk if resident_sup else None))
    return pl.pallas_call(
        kernel,
        out_shape=jax.ShapeDtypeStruct((n_pad, p), out_dtype),
        grid_spec=pltpu.PrefetchScalarGridSpec(
            num_scalar_prefetch=0,
            grid=(n_pad // tm, n_pad // tk),
            in_specs=[pl.BlockSpec((tm, tk), lambda i, k: (i, k)),
                      _sup_spec(n_pad, tk, p, resident_sup),
                      pl.BlockSpec((1, p), lambda i, k: (0, 0)),
                      pl.BlockSpec((tm, 1), lambda i, k: (i, 0))],
            out_specs=pl.BlockSpec((tm, p), lambda i, k: (i, 0)),
            scratch_shapes=[pltpu.VMEM((tm, p), jnp.float32)]),
        compiler_params=pltpu.CompilerParams(
            dimension_semantics=("parallel", "arbitrary"),
            vmem_limit_bytes=vmem_limit),
    )(adj_p, sup, b_pack, mask_u)


def _call_gcn_pair_union(adj_p, sup, b_pack, mask_u, fea_p, wu_h, wu_f, bu,
                         *, h, alpha, tm, tk, resident_sup, vmem_limit):
    n_pad = adj_p.shape[0]
    p = sup.shape[1]
    f = fea_p.shape[1]
    hup = wu_h.shape[1]
    kernel = functools.partial(_gcn_pair_union_kernel, h=h, alpha=alpha,
                               sup_tk=(tk if resident_sup else None))
    return pl.pallas_call(
        kernel,
        out_shape=jax.ShapeDtypeStruct((n_pad, hup), jnp.float32),
        grid_spec=pltpu.PrefetchScalarGridSpec(
            num_scalar_prefetch=0,
            grid=(n_pad // tm, n_pad // tk),
            in_specs=[pl.BlockSpec((tm, tk), lambda i, k: (i, k)),
                      _sup_spec(n_pad, tk, p, resident_sup),
                      pl.BlockSpec((1, p), lambda i, k: (0, 0)),
                      pl.BlockSpec((tm, 1), lambda i, k: (i, 0)),
                      pl.BlockSpec((tm, f), lambda i, k: (i, 0)),
                      pl.BlockSpec((p, hup), lambda i, k: (0, 0)),
                      pl.BlockSpec((f, hup), lambda i, k: (0, 0)),
                      pl.BlockSpec((1, hup), lambda i, k: (0, 0))],
            out_specs=pl.BlockSpec((tm, hup), lambda i, k: (i, 0)),
            scratch_shapes=[pltpu.VMEM((tm, p), jnp.float32)]),
        compiler_params=pltpu.CompilerParams(
            dimension_semantics=("parallel", "arbitrary"),
            vmem_limit_bytes=vmem_limit),
    )(adj_p, sup, b_pack, mask_u, fea_p, wu_h, wu_f, bu)


# ---------------------------------------------------------------------------
# Layer wrapper
# ---------------------------------------------------------------------------

def dgcn_layer(fea, adj, params, *, num_user, alpha,
               block_m=512, block_k=1024, matmul_dtype=jnp.bfloat16,
               resident_sup=None):
    """fea: (N, F) f32; adj: (N, N) f32 dense normalized adjacency. Returns (N, hidden) f32."""
    n, f = fea.shape
    h = params["w1"].shape[1]
    h_out = params["wu"].shape[0]
    # The PyTorch module only shape-checks when feature_dim == hidden_dim (gc3/gc4 re-consume
    # hidden-dim features); the packed stage-2 weights rely on the same invariant.
    assert params["w3"].shape[0] == h, "DGCNLayer requires feature_dim == hidden_dim"
    assert block_m % 8 == 0 and block_k % 128 == 0 and block_k % block_m == 0

    p_pack = _round_up(2 * h, 128)  # packed width: user lanes [0:h], item lanes [h:2h]
    hup = _round_up(h_out, 128)     # lane-padded output width

    # ---- tiling / padding of the node dimension -------------------------------------
    if n <= block_m:
        tm = tk = n_pad = n                      # single block (full-dim exemption)
    elif n <= block_k:
        tm = block_m
        n_pad = _round_up(n, tm)
        tk = n_pad                               # row-tiled, full-K reduction
    else:
        tm, tk = block_m, block_k
        n_pad = _round_up(n, block_k)

    pad = n_pad - n
    adj_p = jnp.pad(adj, ((0, pad), (0, pad))).astype(matmul_dtype)
    fea_p = jnp.pad(fea, ((0, pad), (0, 0))).astype(matmul_dtype)
    # Per-row user flag (padded rows treated as items; their garbage never propagates
    # because the corresponding adj columns are zero and the output is sliced to [:n]).
    mask_u = (jnp.arange(n_pad) < num_user).astype(jnp.float32).reshape(n_pad, 1)

    vmem_limit = _vmem_limit_bytes()
    sup_bytes = n_pad * p_pack * jnp.dtype(matmul_dtype).itemsize
    if resident_sup is None:
        resident_sup = (2 * sup_bytes) <= (vmem_limit // 2)   # allow for double-buffering
    resident_sup = bool(resident_sup) and (n_pad > tk)        # single-K already resident

    # ---- packed weights / biases ------------------------------------------------------
    def pack_cols(wa, wb):                       # (rows,h)+(rows,h) -> (rows, P)
        rows = wa.shape[0]
        w = jnp.zeros((rows, p_pack), jnp.float32)
        return w.at[:, :h].set(wa).at[:, h:2 * h].set(wb)

    def pack_bias(ba, bb):
        b = jnp.zeros((1, p_pack), jnp.float32)
        return b.at[0, :h].set(ba).at[0, h:2 * h].set(bb)

    w12 = pack_cols(params["w1"], params["w2"]).astype(matmul_dtype)         # (f, P)
    b12 = pack_bias(params["b1"], params["b2"])

    # Stage 2 consumes the packed aui: duplicate [W3|W4] for both input halves so each
    # row (whose inactive half is zero) picks the right weights automatically.
    w34_half = pack_cols(params["w3"][:h], params["w4"][:h])                 # (h, P)
    w34 = (jnp.zeros((p_pack, p_pack), jnp.float32)
           .at[:h].set(w34_half).at[h:2 * h].set(w34_half)).astype(matmul_dtype)
    b34 = pack_bias(params["b3"], params["b4"])

    # Union: cat(aui_ho, fea) @ Wu.T = aui_ho_packed @ Wu_h_pack + fea @ Wu_f
    wut = params["wu"].T.astype(jnp.float32)                                 # (h + f, h_out)
    wu_h_half = jnp.zeros((h, hup), jnp.float32).at[:, :h_out].set(wut[:h])
    wu_h = (jnp.zeros((p_pack, hup), jnp.float32)
            .at[:h].set(wu_h_half).at[h:2 * h].set(wu_h_half)).astype(matmul_dtype)
    wu_f = jnp.zeros((f, hup), jnp.float32).at[:, :h_out].set(wut[h:]).astype(matmul_dtype)
    bu = jnp.zeros((1, hup), jnp.float32).at[0, :h_out].set(params["bu"])

    # ---- stage 1: aui_packed = mask(LeakyReLU(adj @ (fea @ [W1|W2]) + [b1|b2])) -------
    sup12 = _call_support(fea_p, w12, tile=tk, vmem_limit=vmem_limit)
    aui = _call_gcn_pair(adj_p, sup12, b12, mask_u, h=h, alpha=alpha,
                         tm=tm, tk=tk, p=p_pack, out_dtype=matmul_dtype,
                         resident_sup=resident_sup, vmem_limit=vmem_limit)

    # ---- stage 2 (+ fused Union linear / ReLU) ---------------------------------------
    sup34 = _call_support(aui, w34, tile=tk, vmem_limit=vmem_limit)
    out_p = _call_gcn_pair_union(adj_p, sup34, b34, mask_u, fea_p, wu_h, wu_f, bu,
                                 h=h, alpha=alpha, tm=tm, tk=tk,
                                 resident_sup=resident_sup, vmem_limit=vmem_limit)

    return out_p[:n, :h_out]


# ---------------------------------------------------------------------------
# Reference + test
# ---------------------------------------------------------------------------

def _reference(fea, adj, params, *, num_user, alpha):
    def gcn(x, w, b):
        hh = adj @ (x @ w) + b
        return jnp.where(hh > 0, hh, alpha * hh)

    user = gcn(fea, params["w1"], params["b1"])
    item = gcn(fea, params["w2"], params["b2"])
    aui = jnp.concatenate([user[:num_user], item[num_user:]], axis=0)
    user_ho = gcn(aui, params["w3"], params["b3"])
    item_ho = gcn(aui, params["w4"], params["b4"])
    aui_ho = jnp.concatenate([user_ho[:num_user], item_ho[num_user:]], axis=0)
    x_cat = jnp.concatenate([aui_ho, fea], axis=1)
    return jnp.maximum(x_cat @ params["wu"].T + params["bu"], 0.0)


def _make_inputs(key, num_user, num_item, feature_dim, hidden_dim):
    n = num_user + num_item
    ks = jax.random.split(key, 12)
    fea = jax.random.normal(ks[0], (n, feature_dim), dtype=jnp.float32)
    a = jax.random.uniform(ks[1], (n, n), dtype=jnp.float32)
    a = (a + a.T) * 0.5 + jnp.eye(n, dtype=jnp.float32)
    adj = a / jnp.sum(a, axis=1, keepdims=True)

    def u(k, shape, fan_in):
        bound = 1.0 / np.sqrt(fan_in)
        return jax.random.uniform(k, shape, jnp.float32, -bound, bound)

    params = {
        "w1": u(ks[2], (feature_dim, hidden_dim), feature_dim),
        "b1": u(ks[3], (hidden_dim,), feature_dim),
        "w2": u(ks[4], (feature_dim, hidden_dim), feature_dim),
        "b2": u(ks[5], (hidden_dim,), feature_dim),
        "w3": u(ks[6], (feature_dim, hidden_dim), feature_dim),
        "b3": u(ks[7], (hidden_dim,), feature_dim),
        "w4": u(ks[8], (feature_dim, hidden_dim), feature_dim),
        "b4": u(ks[9], (hidden_dim,), feature_dim),
        # nn.Linear(hidden_dim + feature_dim, hidden_dim): weight (out, in), bias (out,)
        "wu": u(ks[10], (hidden_dim, hidden_dim + feature_dim), hidden_dim + feature_dim),
        "bu": u(ks[11], (hidden_dim,), hidden_dim + feature_dim),
    }
    return fea, adj, params


if __name__ == "__main__":
    alpha = 0.2          # opt['leakey']
    feature_dim = 32     # module only shape-checks with feature_dim == hidden_dim
    hidden_dim = 32

    # Case 1: tiny graph, single-block path; user/item split not sublane-aligned.
    # Case 2: larger graph exercising row + K tiling with the VMEM-resident support slab.
    # Case 3: same graph, forcing the streaming support path.
    cases = [
        dict(num_user=7, num_item=9, block_m=512, block_k=1024, resident_sup=None),
        dict(num_user=70, num_item=66, block_m=128, block_k=128, resident_sup=True),
        dict(num_user=70, num_item=66, block_m=128, block_k=128, resident_sup=False),
    ]

    key = jax.random.PRNGKey(0)
    for idx, case in enumerate(cases):
        fea, adj, params = _make_inputs(jax.random.fold_in(key, idx),
                                        case["num_user"], case["num_item"],
                                        feature_dim, hidden_dim)
        out = dgcn_layer(fea, adj, params,
                         num_user=case["num_user"], alpha=alpha,
                         block_m=case["block_m"], block_k=case["block_k"],
                         resident_sup=case["resident_sup"])
        out = jax.block_until_ready(out)
        ref = _reference(fea, adj, params, num_user=case["num_user"], alpha=alpha)
        # bf16 MXU operands with f32 accumulation -> compare loosely against the f32 reference.
        np.testing.assert_allclose(np.asarray(out), np.asarray(ref), rtol=5e-2, atol=5e-2)

    print("KERNEL_OK")
</pallas_src>

<mosaic_0001>
module attributes {stable_mosaic.version = 11 : i64} {
  func.func @_support_kernel(%arg0: i32, %arg1: memref<16x32xbf16, #tpu.memory_space<vmem>>, %arg2: memref<32x128xbf16, #tpu.memory_space<vmem>>, %arg3: memref<16x128xbf16, #tpu.memory_space<vmem>>) attributes {dimension_semantics = [#tpu.dimension_semantics<parallel>], iteration_bounds = array<i64: 1>, scalar_prefetch = 0 : i64, scratch_operands = 0 : i64, tpu.core_type = #tpu.core_type<tc>, window_params = [{transform_indices = @transform_0, window_bounds = array<i64: 16, 32>}, {pipeline_mode = #tpu.pipeline_mode<synchronous>, transform_indices = @transform_1, window_bounds = array<i64: 32, 128>}, {transform_indices = @transform_2, window_bounds = array<i64: 16, 128>}]} {
    %c0 = arith.constant 0 : index
    %c0_0 = arith.constant 0 : index
    %0 = vector.load %arg1[%c0, %c0_0] : memref<16x32xbf16, #tpu.memory_space<vmem>>, vector<16x32xbf16>
    %c0_1 = arith.constant 0 : index
    %c0_2 = arith.constant 0 : index
    %1 = vector.load %arg2[%c0_1, %c0_2] : memref<32x128xbf16, #tpu.memory_space<vmem>>, vector<32x128xbf16>
    %cst = arith.constant dense<0.000000e+00> : vector<16x128xf32>
    %2 = tpu.matmul %0, %1, %cst {dimension_numbers = #tpu.dot_dimension_numbers<[1], [0], [0], [1], [0, 0, 1, 1], [], []>} : vector<16x32xbf16>, vector<32x128xbf16>, vector<16x128xf32> -> vector<16x128xf32>
    %3 = arith.truncf %2 : vector<16x128xf32> to vector<16x128xbf16>
    %c0_3 = arith.constant 0 : index
    %c0_4 = arith.constant 0 : index
    %4 = vector.load %arg3[%c0_3, %c0_4] : memref<16x128xbf16, #tpu.memory_space<vmem>>, vector<16x128xbf16>
    tpu.vector_store %arg3[%c0_3, %c0_4], %3 {strides = array<i32>} : memref<16x128xbf16, #tpu.memory_space<vmem>>, vector<16x128xbf16>,
    return
  }
  func.func @transform_0(%arg0: i32) -> (i32, i32) {
    %c0_i32 = arith.constant 0 : i32
    %c0_i32_0 = arith.constant 0 : i32
    return %arg0, %c0_i32 : i32, i32
  }
  func.func @transform_1(%arg0: i32) -> (i32, i32) {
    %c0_i32 = arith.constant 0 : i32
    %c0_i32_0 = arith.constant 0 : i32
    %c0_i32_1 = arith.constant 0 : i32
    return %c0_i32, %c0_i32_0 : i32, i32
  }
  func.func @transform_2(%arg0: i32) -> (i32, i32) {
    %c0_i32 = arith.constant 0 : i32
    %c0_i32_0 = arith.constant 0 : i32
    return %arg0, %c0_i32 : i32, i32
  }
}

</mosaic_0001>

<llo_original>
// kernel: tpu_custom_call.1
$region0: #{tpu_custom_call.1}
  #allocation0 [shape = 'u32[]', space=smem, size = 0x4, offset = 0x4, fixed_abs, tag = 'smem constant byte address 0x4 - core index']
  #allocation1 [shape = 'u32[144,128]{1,0:T(1,128)}', space=vmem, size = 0x12000, scoped, tag = 'internal scratch']
  %s0 = inlined_call_operand.hbm [shape: bf16[16,32], index: 0, kind: input, shape index: {}]
  %s1 = inlined_call_operand.hbm [shape: bf16[32,128], index: 1, kind: input, shape index: {}]
  %s2 = inlined_call_operand.hbm [shape: bf16[16,128], index: 2, kind: output, shape index: {}]
  %s3 = sld [smem:[#allocation0]]
  $region26: #{tpu_custom_call.1} parent=0
    _
  %s5 = ssub.s32 1, %s3
  %s6 = scalar_select 0, %s5, %s3
  $region1: #{tpu_custom_call.1} parent=0
    #allocation2 [shape = 'u8[4096]{0}', space=vmem, size = 0x1000, scoped, tag = 'input window, operand 0, single buffered']
    #allocation3 [shape = 's32[1]{0}', space=sflag, size = 0x4, scoped, tag = 'scoped memory for tpu_custom_call.1']
    #allocation4 [shape = 's32[1]{0}', space=sflag, size = 0x4, scoped, tag = 'scoped memory for tpu_custom_call.1']
    #allocation5 [shape = 'u8[8192]{0}', space=vmem, size = 0x2000, scoped, tag = 'input window, operand 1, single buffered']
    #allocation6 [shape = 's32[1]{0}', space=sflag, size = 0x4, scoped, tag = 'scoped memory for tpu_custom_call.1']
    #allocation7 [shape = 'u8[4096]{0}', space=vmem, size = 0x1000, scoped, tag = 'output window, operand 0, single buffered']
    %7 = vsyncpa [#allocation3], 0
    %8 = vsyncpa [#allocation6], 0
    %9 = vsyncpa [#allocation4], 0
    // Predicated region
    $region2: #{tpu_custom_call.1} parent=1 // pred_check
      _
    $region3: #{tpu_custom_call.1} parent=1 // pred_check_branch
      %11 = sbr.rel (0) target = $region5
    $region4: #{tpu_custom_call.1} parent=1 // pred_region
      %s13 = ssub.s32 128, 128
      %14 = vsyncadd [#allocation3], %s13
      %s15 = sshll.u32 [#allocation2], 4
      %s16 = int_to_ptr.vmem [resolvable:$true] %s15
      %21 = dma.hbm_to_vmem [thread:$0]  %s0, 128, %s16, [#allocation3], 64, 64, 4
    $region5: #{tpu_custom_call.1} parent=1 // pred_fallthru
      _
    // Predicated region
    $region6: #{tpu_custom_call.1} parent=1 // pred_check
      _
    $region7: #{tpu_custom_call.1} parent=1 // pred_check_branch
      %23 = sbr.rel (0) target = $region9
    $region8: #{tpu_custom_call.1} parent=1 // pred_region
      %s25 = ssub.s32 256, 256
      %26 = vsyncadd [#allocation6], %s25
      %s27 = sshll.u32 [#allocation5], 4
      %s28 = int_to_ptr.vmem [resolvable:$true] %s27
      %33 = dma.hbm_to_vmem [thread:$0]  %s1, 256, %s28, [#allocation6], 64, 64, 4
    $region9: #{tpu_custom_call.1} parent=1 // pred_fallthru
      _
    // Predicated region
    $region10: #{tpu_custom_call.1} parent=1 // pred_check
      _
    $region11: #{tpu_custom_call.1} parent=1 // pred_check_branch
      %35 = sbr.rel (0) target = $region13
    $region12: #{tpu_custom_call.1} parent=1 // pred_region
      %36 = dma.done [#allocation3], 128
    $region13: #{tpu_custom_call.1} parent=1 // pred_fallthru
      _
    // Predicated region
    $region14: #{tpu_custom_call.1} parent=1 // pred_check
      _
    $region15: #{tpu_custom_call.1} parent=1 // pred_check_branch
      %38 = sbr.rel (0) target = $region17
    $region16: #{tpu_custom_call.1} parent=1 // pred_region
      %39 = dma.done [#allocation6], 256
    $region17: #{tpu_custom_call.1} parent=1 // pred_fallthru
      _
    %v41 = vld [vmem:[#allocation2] sm:$0xf]
    %v42 = vld [vmem:[#allocation2 + $0x4] sm:$0xf]
    %v43 = vld [vmem:[#allocation5] sm:$0xf]
    %v44 = vld [vmem:[#allocation5 + $0x4] sm:$0xf]
    %v45 = vld [vmem:[#allocation5 + $0x8] sm:$0xf]
    %v46 = vld [vmem:[#allocation5 + $0xc] sm:$0xf]
    %v49 = vunpack.c.l.b16 %v41
    %v50 = vunpack.c.l.b16 %v42
    %v51 = vpack.c.b16 %v50, %v49
    %v56 = vunpack.c.l.b16 %v43
    %v57 = vunpack.c.l.b16 %v44
    %v58 = vunpack.c.l.b16 %v45
    %v59 = vunpack.c.l.b16 %v46
    %v60 = vpack.c.b16 %v57, %v56
    %v61 = vpack.c.b16 %v59, %v58
    %vm64 = vcmask 261120
    %v66 = vsel %vm64, %v51, 0
    %68 = vmatprep.subr.bf16.mxu0 0
    %69 = vmatpush1.bf16.msra.mxu0 %v60
    %70 = vmatprep.subr.bf16.mxu0 0
    %71 = vmatpush1.bf16.msra.mxu0 %v61
    %72 = vmatprep.subr.bf16.mxu0 0
    %73 = vmatpush1.bf16.msra.mxu0 0
    %74 = vmatprep.subr.bf16.mxu0 0
    %75 = vmatpush1.bf16.msra.mxu0 0
    %76 = vmatprep.subr.bf16.mxu0 0
    %77 = vmatpush1.bf16.msra.mxu0 0
    %78 = vmatprep.subr.bf16.mxu0 0
    %79 = vmatpush1.bf16.msra.mxu0 0
    %80 = vmatprep.subr.bf16.mxu0 0
    %81 = vmatpush1.bf16.msra.mxu0 0
    %82 = vmatprep.subr.bf16.mxu0 0
    %83 = vmatpush1.bf16.msra.mxu0 0
    %84 = vmatprep.subr.bf16.mxu0 0
    %85 = vmatpush1.bf16.msra.mxu0 0
    %86 = vmatprep.subr.bf16.mxu0 0
    %87 = vmatpush1.bf16.msra.mxu0 0
    %88 = vmatprep.subr.bf16.mxu0 0
    %89 = vmatpush1.bf16.msra.mxu0 0
    %90 = vmatprep.subr.bf16.mxu0 0
    %91 = vmatpush1.bf16.msra.mxu0 0
    %92 = vmatprep.subr.bf16.mxu0 0
    %93 = vmatpush1.bf16.msra.mxu0 0
    %94 = vmatprep.subr.bf16.mxu0 0
    %95 = vmatpush1.bf16.msra.mxu0 0
    %96 = vmatprep.subr.bf16.mxu0 0
    %97 = vmatpush1.bf16.msra.mxu0 0
    %98 = vmatprep.subr.bf16.mxu0 0
    %99 = vmatpush1.bf16.msra.mxu0 0
    %100 = vmatprep.mubr.bf16.mxu0 0
    %101 = vmatmul.mubr.bf16.gmra.mrb[0].mxu0 %v66
    %v102 = vpop.f32.mrb[0].mxu0
    %v103 = vadd.f32 0.0, %v102
    %v104 = vpop.f32.mrb[0].mxu0
    %v105 = vpop.f32.mrb[0].mxu0
    %v106 = vadd.f32 0.0, %v105
    %v107 = vpop.f32.mrb[0].mxu0
    %108 = vdwg.mxu0
    %v109 = vpack.c.bf16 %v106, %v103
    %v111 = vunpack.c.l.b16 %v109
    %v112 = vunpack.c.h.b16 %v109
    %v113 = vpack.c.b16 %v111, %v111
    %v114 = vpack.c.b16 %v112, %v112
    %117 = vst [vmem:[#allocation7] sm:$0xf] %v113
    %118 = vst [vmem:[#allocation7 + $0x4] sm:$0xf] %v114
    // Predicated region
    $region18: #{tpu_custom_call.1} parent=1 // pred_check
      _
    $region19: #{tpu_custom_call.1} parent=1 // pred_check_branch
      %120 = sbr.rel (0) target = $region21
    $region20: #{tpu_custom_call.1} parent=1 // pred_region
      %s122 = ssub.s32 128, 128
      %123 = vsyncadd [#allocation4], %s122
      %s124 = sshll.u32 [#allocation7], 4
      %s125 = int_to_ptr.vmem [resolvable:$true] %s124
      %130 = dma.vmem_to_hbm [thread:$0]  %s125, 128, %s2, [#allocation4], 64, 64, 4
    $region21: #{tpu_custom_call.1} parent=1 // pred_fallthru
      _
    // Predicated region
    $region22: #{tpu_custom_call.1} parent=1 // pred_check
      _
    $region23: #{tpu_custom_call.1} parent=1 // pred_check_branch
      %132 = sbr.rel (0) target = $region25
    $region24: #{tpu_custom_call.1} parent=1 // pred_region
      %133 = dma.done [#allocation4], 128
    $region25: #{tpu_custom_call.1} parent=1 // pred_fallthru
      _
    %134 = vsyncpa [#allocation3], 1
    %135 = vsyncpa [#allocation6], 1
    %136 = vsyncpa [#allocation4], 1

</llo_original>
